<compile_context>
chip_gen: v5e
topology: v5e:2x2
jax: 0.10.0
libtpu: 0.0.40
codegen_flags: <defaults>
</compile_context>

<pallas_src>
import functools

import jax
import jax.numpy as jnp
from jax import lax
from jax.experimental import pallas as pl
from jax.experimental.pallas import tpu as pltpu


def _bias_product_kernel(smooth_ref, logits_ref, bias_ref, labels_ref,
                         partial_ref, *, batch, block_rows, needs_mask):
    i = pl.program_id(0)
    smooth = smooth_ref[0]            # constant_smooth + sigmoid(a), f32 scalar

    logits = logits_ref[...].astype(jnp.float32)
    bias = bias_ref[...].astype(jnp.float32)
    labels = labels_ref[...].astype(jnp.float32)

    # d = lp - lomp = logits + log(bias + smooth) - log1p(smooth - bias)
    d = logits + jnp.log(bias + smooth) - jnp.log1p(smooth - bias)
    # per_elem = labels*d - softplus(d); softplus(d) = max(d,0) + log1p(exp(-|d|))
    per_elem = labels * d - (jnp.maximum(d, 0.0) + jnp.log1p(jnp.exp(-jnp.abs(d))))

    if needs_mask:
        # The tail block reads past the end of the batch; those rows hold
        # undefined data (possibly Inf/NaN) and must be selected away before
        # the reduction.
        rows = i * block_rows + lax.broadcasted_iota(jnp.int32, per_elem.shape, 0)
        per_elem = jnp.where(rows < batch, per_elem, 0.0)

    partial = jnp.sum(per_elem)
    # Lane-dense, unmasked store of this tile's partial sum; the wrapper reads
    # element [i, 0, 0] of each block and finishes the reduction.
    partial_ref[...] = jnp.full(partial_ref.shape, partial, dtype=partial_ref.dtype)


def _pick_block_rows(batch, n_ans, itemsize, block_rows, *, target_tiles=4,
                     input_vmem_budget=40 << 20, max_rows=1024):
    """Tile-row count: byte-budgeted, sublane-aligned, >= target_tiles tiles."""
    row_align = 16 if itemsize <= 2 else 8
    if batch <= row_align:
        return batch                              # one full-extent block
    cap = max_rows if block_rows is None else int(block_rows)
    bytes_per_row = 3 * 2 * n_ans * itemsize      # 3 inputs x double buffer
    tb_bytes = max(row_align, input_vmem_budget // bytes_per_row)
    tb_par = -(-batch // target_tiles)            # keep >= target_tiles steps
    tb = min(cap, tb_bytes, tb_par, batch)
    tb = max(row_align, (tb // row_align) * row_align)
    return min(tb, batch)


def bias_product_loss(hidden, logits, bias, labels, smooth_param=None,
                      *, smooth=True, constant_smooth=0.0, block_rows=None):
    """Pallas implementation of BiasProduct.forward. Returns a scalar loss."""
    del hidden  # unused by the forward pass, kept for API parity with the module
    batch, n_ans = logits.shape
    assert bias.shape == (batch, n_ans) and labels.shape == (batch, n_ans)

    # Precompute the full smoothing scalar in the wrapper (no per-step exp/div).
    smooth_total = jnp.float32(constant_smooth)
    if smooth:
        if smooth_param is None:
            smooth_param = jnp.zeros((1,), jnp.float32)
        smooth_total = smooth_total + jax.nn.sigmoid(
            smooth_param.astype(jnp.float32)[0])
    smooth_arr = jnp.reshape(smooth_total, (1,)).astype(jnp.float32)

    itemsize = max(jnp.dtype(logits.dtype).itemsize,
                   jnp.dtype(bias.dtype).itemsize,
                   jnp.dtype(labels.dtype).itemsize)
    tb = _pick_block_rows(batch, n_ans, itemsize, block_rows)
    num_tiles = pl.cdiv(batch, tb)
    needs_mask = (batch % tb) != 0

    # Scoped VMEM: enough for the double-buffered tiles, above the 16/32 MiB
    # defaults when needed, but under v7x's 64 MiB-per-TC physical VMEM.
    in_bytes = 3 * 2 * tb * n_ans * itemsize
    vmem_limit = int(min(56 << 20, max(32 << 20, in_bytes + (4 << 20))))

    kernel = functools.partial(
        _bias_product_kernel, batch=batch, block_rows=tb, needs_mask=needs_mask)

    partials = pl.pallas_call(
        kernel,
        out_shape=jax.ShapeDtypeStruct((num_tiles, 8, 128), jnp.float32),
        grid_spec=pltpu.PrefetchScalarGridSpec(
            num_scalar_prefetch=1,                              # smooth -> SMEM
            grid=(num_tiles,),
            in_specs=[
                pl.BlockSpec((tb, n_ans), lambda i, s: (i, 0)),  # logits tile
                pl.BlockSpec((tb, n_ans), lambda i, s: (i, 0)),  # bias tile
                pl.BlockSpec((tb, n_ans), lambda i, s: (i, 0)),  # labels tile
            ],
            out_specs=pl.BlockSpec((1, 8, 128), lambda i, s: (i, 0, 0)),
        ),
        compiler_params=pltpu.CompilerParams(
            dimension_semantics=("parallel",),
            vmem_limit_bytes=vmem_limit),
    )(smooth_arr, logits, bias, labels)

    # Final reduction in the wrapper (keeps the grid axis 'parallel').
    return -jnp.sum(partials[:, 0, 0]) / jnp.float32(batch)


def _reference_loss(logits, bias, labels, smooth_param,
                    smooth=True, constant_smooth=0.0):
    """Pure-JAX reference mirroring the PyTorch code, for verification."""
    logits = logits.astype(jnp.float32)
    bias = bias.astype(jnp.float32)
    labels = labels.astype(jnp.float32)
    s = jnp.float32(constant_smooth)
    if smooth:
        s = s + jax.nn.sigmoid(smooth_param.astype(jnp.float32)[0])
    bias_lp = jnp.log(bias + s)
    bias_l_inv = jnp.log1p(-bias + s)
    log_prob = -jax.nn.softplus(-logits)
    log_one_minus_prob = -logits + log_prob
    lp = log_prob + bias_lp
    lomp = log_one_minus_prob + bias_l_inv
    norm = jnp.maximum(lp, lomp) + jnp.log1p(jnp.exp(-jnp.abs(lp - lomp)))
    lp, lomp = lp - norm, lomp - norm
    return -(lp * labels + (1.0 - labels) * lomp).sum(1).mean(0)


if __name__ == "__main__":
    n_hidden = 32

    # --- Case 1: tiny module-consistent shapes, default BiasProduct config ---
    batch, n_ans = 2, 16
    key = jax.random.PRNGKey(0)
    k_h, k_l, k_b, k_y = jax.random.split(key, 4)
    hidden = jax.random.normal(k_h, (batch, n_hidden), dtype=jnp.float32)
    logits = jax.random.normal(k_l, (batch, n_ans), dtype=jnp.float32)
    bias = jax.nn.sigmoid(jax.random.normal(k_b, (batch, n_ans), dtype=jnp.float32))
    labels = jax.random.uniform(k_y, (batch, n_ans), dtype=jnp.float32)
    smooth_param = jnp.full((1,), -1.0, dtype=jnp.float32)   # smooth_init = -1

    loss = jax.block_until_ready(
        bias_product_loss(hidden, logits, bias, labels, smooth_param,
                          smooth=True, constant_smooth=0.0))
    ref = _reference_loss(logits, bias, labels, smooth_param,
                          smooth=True, constant_smooth=0.0)
    assert jnp.allclose(loss, ref, atol=1e-5, rtol=1e-5), (loss, ref)

    # --- Case 2: multi-tile grid, constant smoothing only, exact tiling ---
    batch2, n_ans2 = 40, 200
    k_l2, k_b2, k_y2 = jax.random.split(jax.random.PRNGKey(1), 3)
    logits2 = jax.random.normal(k_l2, (batch2, n_ans2), dtype=jnp.float32)
    bias2 = jax.nn.sigmoid(jax.random.normal(k_b2, (batch2, n_ans2), dtype=jnp.float32))
    labels2 = jax.random.uniform(k_y2, (batch2, n_ans2), dtype=jnp.float32)
    hidden2 = jnp.zeros((batch2, n_hidden), dtype=jnp.float32)

    loss2 = jax.block_until_ready(
        bias_product_loss(hidden2, logits2, bias2, labels2, None,
                          smooth=False, constant_smooth=0.1, block_rows=16))
    ref2 = _reference_loss(logits2, bias2, labels2, None,
                           smooth=False, constant_smooth=0.1)
    assert jnp.allclose(loss2, ref2, atol=1e-5, rtol=1e-5), (loss2, ref2)

    # --- Case 3: ragged batch (no wrapper-side pad; in-kernel row mask) ---
    batch3, n_ans3 = 37, 200
    k_l3, k_b3, k_y3 = jax.random.split(jax.random.PRNGKey(2), 3)
    logits3 = jax.random.normal(k_l3, (batch3, n_ans3), dtype=jnp.float32)
    bias3 = jax.nn.sigmoid(jax.random.normal(k_b3, (batch3, n_ans3), dtype=jnp.float32))
    labels3 = jax.random.uniform(k_y3, (batch3, n_ans3), dtype=jnp.float32)
    hidden3 = jnp.zeros((batch3, n_hidden), dtype=jnp.float32)

    loss3 = jax.block_until_ready(
        bias_product_loss(hidden3, logits3, bias3, labels3, smooth_param,
                          smooth=True, constant_smooth=0.0, block_rows=16))
    ref3 = _reference_loss(logits3, bias3, labels3, smooth_param,
                           smooth=True, constant_smooth=0.0)
    assert jnp.allclose(loss3, ref3, atol=1e-5, rtol=1e-5), (loss3, ref3)

    # --- Case 4: bf16 streaming inputs (half HBM traffic), ragged 16-row tiles ---
    batch4, n_ans4 = 24, 128
    k_l4, k_b4, k_y4 = jax.random.split(jax.random.PRNGKey(3), 3)
    logits4 = jax.random.normal(k_l4, (batch4, n_ans4),
                                dtype=jnp.float32).astype(jnp.bfloat16)
    bias4 = jax.nn.sigmoid(jax.random.normal(k_b4, (batch4, n_ans4),
                                              dtype=jnp.float32)).astype(jnp.bfloat16)
    labels4 = jax.random.uniform(k_y4, (batch4, n_ans4),
                                 dtype=jnp.float32).astype(jnp.bfloat16)
    hidden4 = jnp.zeros((batch4, n_hidden), dtype=jnp.float32)

    loss4 = jax.block_until_ready(
        bias_product_loss(hidden4, logits4, bias4, labels4, smooth_param,
                          smooth=True, constant_smooth=0.0))
    ref4 = _reference_loss(logits4, bias4, labels4, smooth_param,
                           smooth=True, constant_smooth=0.0)
    assert jnp.allclose(loss4, ref4, atol=1e-4, rtol=1e-4), (loss4, ref4)

    print("KERNEL_OK")
</pallas_src>

<mosaic_0001>
module attributes {stable_mosaic.version = 11 : i64} {
  func.func @_bias_product_kernel(%arg0: i32, %arg1: memref<1xf32, #tpu.memory_space<smem>>, %arg2: memref<2x16xf32, #tpu.memory_space<vmem>>, %arg3: memref<2x16xf32, #tpu.memory_space<vmem>>, %arg4: memref<2x16xf32, #tpu.memory_space<vmem>>, %arg5: memref<1x8x128xf32, #tpu.memory_space<vmem>>) attributes {dimension_semantics = [#tpu.dimension_semantics<parallel>], iteration_bounds = array<i64: 1>, scalar_prefetch = 1 : i64, scratch_operands = 0 : i64, tpu.core_type = #tpu.core_type<tc>, window_params = [{transform_indices = @transform_0, window_bounds = array<i64: 2, 16>}, {transform_indices = @transform_1, window_bounds = array<i64: 2, 16>}, {transform_indices = @transform_2, window_bounds = array<i64: 2, 16>}, {transform_indices = @transform_3, window_bounds = array<i64: 1, 8, 128>}]} {
    %c0 = arith.constant 0 : index
    %0 = memref.load %arg1[%c0] : memref<1xf32, #tpu.memory_space<smem>>
    %c0_0 = arith.constant 0 : index
    %c0_1 = arith.constant 0 : index
    %1 = vector.load %arg2[%c0_0, %c0_1] : memref<2x16xf32, #tpu.memory_space<vmem>>, vector<2x16xf32>
    %c0_2 = arith.constant 0 : index
    %c0_3 = arith.constant 0 : index
    %2 = vector.load %arg3[%c0_2, %c0_3] : memref<2x16xf32, #tpu.memory_space<vmem>>, vector<2x16xf32>
    %c0_4 = arith.constant 0 : index
    %c0_5 = arith.constant 0 : index
    %3 = vector.load %arg4[%c0_4, %c0_5] : memref<2x16xf32, #tpu.memory_space<vmem>>, vector<2x16xf32>
    %4 = vector.broadcast %0 : f32 to vector<2x16xf32>
    %5 = arith.addf %2, %4 : vector<2x16xf32>
    %6 = math.log %5 : vector<2x16xf32>
    %7 = arith.addf %1, %6 : vector<2x16xf32>
    %8 = vector.broadcast %0 : f32 to vector<2x16xf32>
    %9 = arith.subf %8, %2 : vector<2x16xf32>
    %10 = math.log1p %9 : vector<2x16xf32>
    %11 = arith.subf %7, %10 : vector<2x16xf32>
    %12 = arith.mulf %3, %11 : vector<2x16xf32>
    %cst = arith.constant 0.000000e+00 : f32
    %13 = vector.broadcast %cst : f32 to vector<2x16xf32>
    %14 = arith.maximumf %11, %13 : vector<2x16xf32>
    %15 = math.absf %11 : vector<2x16xf32>
    %cst_6 = arith.constant 0.000000e+00 : f32
    %16 = vector.broadcast %cst_6 : f32 to vector<2x16xf32>
    %17 = arith.subf %16, %15 : vector<2x16xf32>
    %18 = math.exp %17 : vector<2x16xf32>
    %19 = math.log1p %18 : vector<2x16xf32>
    %20 = arith.addf %14, %19 : vector<2x16xf32>
    %21 = arith.subf %12, %20 : vector<2x16xf32>
    %22 = vector.shape_cast %21 : vector<2x16xf32> to vector<1x2x16xf32>
    %cst_7 = arith.constant dense<0.000000e+00> : vector<1xf32>
    %23 = vector.multi_reduction <add>, %22, %cst_7 [1, 2] : vector<1x2x16xf32> to vector<1xf32>
    %24 = vector.shape_cast %23 : vector<1xf32> to vector<1x1x1xf32>
    %25 = vector.extract %24[0, 0, 0] : f32 from vector<1x1x1xf32>
    %26 = vector.broadcast %25 : f32 to vector<1x8x128xf32>
    %c0_8 = arith.constant 0 : index
    %c0_9 = arith.constant 0 : index
    %c0_10 = arith.constant 0 : index
    %27 = vector.load %arg5[%c0_8, %c0_9, %c0_10] : memref<1x8x128xf32, #tpu.memory_space<vmem>>, vector<1x8x128xf32>
    tpu.vector_store %arg5[%c0_8, %c0_9, %c0_10], %26 {strides = array<i32>} : memref<1x8x128xf32, #tpu.memory_space<vmem>>, vector<1x8x128xf32>,
    return
  }
  func.func @transform_0(%arg0: i32, %arg1: memref<1xf32, #tpu.memory_space<smem>>) -> (i32, i32) {
    %c0_i32 = arith.constant 0 : i32
    %c0_i32_0 = arith.constant 0 : i32
    return %arg0, %c0_i32 : i32, i32
  }
  func.func @transform_1(%arg0: i32, %arg1: memref<1xf32, #tpu.memory_space<smem>>) -> (i32, i32) {
    %c0_i32 = arith.constant 0 : i32
    %c0_i32_0 = arith.constant 0 : i32
    return %arg0, %c0_i32 : i32, i32
  }
  func.func @transform_2(%arg0: i32, %arg1: memref<1xf32, #tpu.memory_space<smem>>) -> (i32, i32) {
    %c0_i32 = arith.constant 0 : i32
    %c0_i32_0 = arith.constant 0 : i32
    return %arg0, %c0_i32 : i32, i32
  }
  func.func @transform_3(%arg0: i32, %arg1: memref<1xf32, #tpu.memory_space<smem>>) -> (i32, i32, i32) {
    %c0_i32 = arith.constant 0 : i32
    %c0_i32_0 = arith.constant 0 : i32
    %c0_i32_1 = arith.constant 0 : i32
    return %arg0, %c0_i32, %c0_i32_0 : i32, i32, i32
  }
}

</mosaic_0001>

<llo_original>
// kernel: tpu_custom_call.1
$region0: #{tpu_custom_call.1}
  #allocation0 [shape = 'u32[]', space=smem, size = 0x4, offset = 0x4, fixed_abs, tag = 'smem constant byte address 0x4 - core index']
  #allocation1 [shape = 'u32[72,128]{1,0:T(1,128)}', space=vmem, size = 0x9000, scoped, tag = 'internal scratch']
  #allocation2 [shape = 's32[1]{0}', space=sflag, size = 0x4, scoped, tag = 'scoped memory for tpu_custom_call.1']
  #allocation3 [shape = 'f32[1]{0:T(128)S(6)}', space=smem, size = 0x200, scoped, tag = 'prefetched SMEM operand 0']
  %s0 = inlined_call_operand.<no memory space> [shape: f32[1], index: 0, kind: input, shape index: {}]
  %s1 = inlined_call_operand.vmem [shape: f32[2,16], index: 1, kind: input, shape index: {}]
  %s2 = inlined_call_operand.hbm [shape: f32[2,16], index: 2, kind: input, shape index: {}]
  %s3 = inlined_call_operand.hbm [shape: f32[2,16], index: 3, kind: input, shape index: {}]
  %s4 = inlined_call_operand.hbm [shape: f32[1,8,128], index: 4, kind: output, shape index: {}]
  %s5 = sld [smem:[#allocation0]]
  $region30: #{tpu_custom_call.1} parent=0
    _
  %s7 = ssub.s32 1, %s5
  %s8 = scalar_select 0, %s7, %s5
  %9 = sst [smem:[#allocation3]] %s0
  $region1: #{tpu_custom_call.1} parent=0
    #allocation4 [shape = 'u8[1024]{0}', space=vmem, size = 0x400, scoped, tag = 'input window, operand 2, single buffered']
    #allocation5 [shape = 's32[1]{0}', space=sflag, size = 0x4, scoped, tag = 'scoped memory for tpu_custom_call.1']
    #allocation6 [shape = 's32[1]{0}', space=sflag, size = 0x4, scoped, tag = 'scoped memory for tpu_custom_call.1']
    #allocation7 [shape = 'u8[1024]{0}', space=vmem, size = 0x400, scoped, tag = 'input window, operand 3, single buffered']
    #allocation8 [shape = 's32[1]{0}', space=sflag, size = 0x4, scoped, tag = 'scoped memory for tpu_custom_call.1']
    #allocation9 [shape = 'u8[4096]{0}', space=vmem, size = 0x1000, scoped, tag = 'output window, operand 0, single buffered']
    %10 = vsyncpa [#allocation5], 0
    %11 = vsyncpa [#allocation8], 0
    %12 = vsyncpa [#allocation6], 0
    // Predicated region
    $region2: #{tpu_custom_call.1} parent=1 // pred_check
      _
    $region3: #{tpu_custom_call.1} parent=1 // pred_check_branch
      %14 = sbr.rel (0) target = $region5
    $region4: #{tpu_custom_call.1} parent=1 // pred_region
      _
    $region5: #{tpu_custom_call.1} parent=1 // pred_fallthru
      _
    // Predicated region
    $region6: #{tpu_custom_call.1} parent=1 // pred_check
      _
    $region7: #{tpu_custom_call.1} parent=1 // pred_check_branch
      %16 = sbr.rel (0) target = $region9
    $region8: #{tpu_custom_call.1} parent=1 // pred_region
      %18 = vsyncadd [#allocation5], 0
      %s20 = sshll.u32 %s2, 4
      %s21 = int_to_ptr.hbm [resolvable:$true] %s20
      %s22 = sshll.u32 [#allocation4], 4
      %s23 = int_to_ptr.vmem [resolvable:$true] %s22
      %25 = dma.hbm_to_vmem [thread:$0]  %s21, 32, %s23, [#allocation5]
    $region9: #{tpu_custom_call.1} parent=1 // pred_fallthru
      _
    // Predicated region
    $region10: #{tpu_custom_call.1} parent=1 // pred_check
      _
    $region11: #{tpu_custom_call.1} parent=1 // pred_check_branch
      %27 = sbr.rel (0) target = $region13
    $region12: #{tpu_custom_call.1} parent=1 // pred_region
      %29 = vsyncadd [#allocation8], 0
      %s31 = sshll.u32 %s3, 4
      %s32 = int_to_ptr.hbm [resolvable:$true] %s31
      %s33 = sshll.u32 [#allocation7], 4
      %s34 = int_to_ptr.vmem [resolvable:$true] %s33
      %36 = dma.hbm_to_vmem [thread:$0]  %s32, 32, %s34, [#allocation8]
    $region13: #{tpu_custom_call.1} parent=1 // pred_fallthru
      _
    // Predicated region
    $region14: #{tpu_custom_call.1} parent=1 // pred_check
      _
    $region15: #{tpu_custom_call.1} parent=1 // pred_check_branch
      %38 = sbr.rel (0) target = $region17
    $region16: #{tpu_custom_call.1} parent=1 // pred_region
      %40 = dma.done [#allocation5], 32
    $region17: #{tpu_custom_call.1} parent=1 // pred_fallthru
      _
    // Predicated region
    $region18: #{tpu_custom_call.1} parent=1 // pred_check
      _
    $region19: #{tpu_custom_call.1} parent=1 // pred_check_branch
      %42 = sbr.rel (0) target = $region21
    $region20: #{tpu_custom_call.1} parent=1 // pred_region
      %44 = dma.done [#allocation8], 32
    $region21: #{tpu_custom_call.1} parent=1 // pred_fallthru
      _
    %s45 = sld [smem:[#allocation3]]
    %v46 = vld [vmem:[%s1] sm:$0x3]
    %v47 = vld [vmem:[#allocation4] sm:$0x3]
    %v48 = vld [vmem:[#allocation7] sm:$0x3]
    %v49 = vstv %s45
    %v50 = vadd.f32 %v47, %v49
    %v51 = vlog2.pop %v50
    %v52 = vmul.f32 %v51, 0.6931472
    %v53 = vadd.f32 %v46, %v52
    %v54 = vsub.f32 %v49, %v47
    %v55 = vadd.f32 %v54, 1.0
    %v56 = vlog2.pop %v55
    %v57 = vmul.f32 %v56, 0.6931472
    %v58 = vmul.f32 -0.5, %v54
    %v59 = vadd.f32 %v58, 1.0
    %v60 = vmul.f32 %v59, %v54
    %v61 = vand.u32 2147483647, %v54
    %vm62 = vcmp.lt.f32.partialorder %v61, 0.0004427343
    %v63 = vsel %vm62, %v60, %v57
    %v64 = vsub.f32 %v53, %v63
    %v65 = vmul.f32 %v48, %v64
    %v66 = vmax.f32 %v64, 0.0
    %v67 = vand.u32 2147483647, %v64
    %v68 = vsub.f32 0.0, %v67
    %v69 = vmul.f32 %v68, 1.442695
    %v70 = vpow.pop %v69
    %v71 = vadd.f32 %v70, 1.0
    %v72 = vlog2.pop %v71
    %v73 = vmul.f32 %v72, 0.6931472
    %v74 = vmul.f32 -0.5, %v70
    %v75 = vadd.f32 %v74, 1.0
    %v76 = vmul.f32 %v75, %v70
    %v77 = vand.u32 2147483647, %v70
    %vm78 = vcmp.lt.f32.partialorder %v77, 0.0004427343
    %v79 = vsel %vm78, %v76, %v73
    %v80 = vadd.f32 %v66, %v79
    %v81 = vsub.f32 %v65, %v80
    %vm82 = vcmask 123904
    %v83 = vsel %vm82, %v81, 0.0
    %84 = vadd.xlane.f32.xlu0 %v83
    %v85 = vpop.xlane.xlu0 %84
    %v86 = vrot.slane %v85, 4
    %v87 = vadd.f32 %v85, %v86
    %v88 = vrot.slane %v87, 2
    %v89 = vadd.f32 %v87, %v88
    %v90 = vrot.slane %v89, 1
    %v91 = vadd.f32 %v89, %v90
    %s92 = vtos %v91
    %v93 = vstv %s92
    %94 = vst [vmem:[#allocation9] sm:$0xff] %v93
    // Predicated region
    $region22: #{tpu_custom_call.1} parent=1 // pred_check
      _
    $region23: #{tpu_custom_call.1} parent=1 // pred_check_branch
      %96 = sbr.rel (0) target = $region25
    $region24: #{tpu_custom_call.1} parent=1 // pred_region
      %98 = vsyncadd [#allocation6], 0
      %s100 = sshll.u32 [#allocation9], 4
      %s101 = int_to_ptr.vmem [resolvable:$true] %s100
      %s102 = sshll.u32 %s4, 4
      %s103 = int_to_ptr.hbm [resolvable:$true] %s102
      %105 = dma.vmem_to_hbm [thread:$0]  %s101, 128, %s103, [#allocation6]
    $region25: #{tpu_custom_call.1} parent=1 // pred_fallthru
      _
    // Predicated region
    $region26: #{tpu_custom_call.1} parent=1 // pred_check
      _
    $region27: #{tpu_custom_call.1} parent=1 // pred_check_branch
      %107 = sbr.rel (0) target = $region29
    $region28: #{tpu_custom_call.1} parent=1 // pred_region
      %109 = dma.done [#allocation6], 128
    $region29: #{tpu_custom_call.1} parent=1 // pred_fallthru
      _
    %110 = vsyncpa [#allocation5], 1
    %111 = vsyncpa [#allocation8], 1
    %112 = vsyncpa [#allocation6], 1

</llo_original>
